<compile_context>
chip_gen: v5e
topology: v5e:2x2
jax: 0.10.0
libtpu: 0.0.40
codegen_flags: <defaults>
</compile_context>

<pallas_src>
import functools

import jax
import jax.numpy as jnp
from jax.experimental import pallas as pl
from jax.experimental.pallas import tpu as pltpu


# --------------------------------------------------------------------------- #
# Pass 1: convolution (fused MXU matmul or tap-accumulate) + partial BN stats  #
# --------------------------------------------------------------------------- #
def _conv_stats_kernel(zf_ref, w_ref, conv_ref, psum_ref, psq_ref, *scratch,
                       KH, KW, Cin, Wp, Wout, Hout, Lw, B, use_im2col):
    """One block of B images per grid step.

    zf_ref   (B, Cin, Lp)     padded images, spatially flattened (+KW-1 tail)
    w_ref    (Cout, K9)       flattened conv weight, K9 = KH*KW*Cin
    conv_ref (B, Cout, Lout)  compact conv output block (compute dtype)
    psum_ref (Cout, 1)        f32 per-step partial sum     (disjoint per step)
    psq_ref  (Cout, 1)        f32 per-step partial sum^2   (disjoint per step)
    scratch: [patches (K9, B*Lw) if use_im2col] + [compact (Cout, Lout) f32]
    """
    if use_im2col:
        patches_ref, compact_ref = scratch
    else:
        (compact_ref,) = scratch

    conv_all = None
    if use_im2col:
        # Build the im2col matrix in VMEM from *contiguous* windows of the
        # flattened padded image: tap (kh, kw) starts at offset kh*Wp + kw.
        # The KH*KW duplication therefore exists only in VMEM, never in HBM.
        # TODO(synk): the kw shifts could reuse one kh-row load + pltpu.roll
        # (XLU) instead of KW separately-realigned window loads.
        for b in range(B):
            for kh in range(KH):
                for kw in range(KW):
                    t = kh * KW + kw
                    off = kh * Wp + kw
                    patches_ref[t * Cin:(t + 1) * Cin,
                                b * Lw:(b + 1) * Lw] = zf_ref[b, :, off:off + Lw]
        # Single fused MXU matmul: (Cout, K9) @ (K9, B*Lw), f32 accumulation.
        conv_all = jnp.dot(w_ref[...], patches_ref[...],
                           preferred_element_type=jnp.float32)

    s = jnp.zeros(psum_ref.shape, jnp.float32)
    q = jnp.zeros(psq_ref.shape, jnp.float32)

    for b in range(B):
        if use_im2col:
            conv_b = conv_all[:, b * Lw:(b + 1) * Lw]          # (Cout, Lw) f32
        else:
            # Tap-accumulate: KH*KW chained accumulating dots with K = Cin
            # (no scratch stores; cheap on v7x's MRB, vst-friendly on v5e).
            conv_b = None
            for kh in range(KH):
                for kw in range(KW):
                    t = kh * KW + kw
                    off = kh * Wp + kw
                    d = jnp.dot(w_ref[:, t * Cin:(t + 1) * Cin],
                                zf_ref[b, :, off:off + Lw],
                                preferred_element_type=jnp.float32)
                    conv_b = d if conv_b is None else conv_b + d

        # Drop the horizontal overhang on chip -> compact (Cout, Hout*Wout).
        for h in range(Hout):
            compact_ref[:, h * Wout:(h + 1) * Wout] = (
                conv_b[:, h * Wp:h * Wp + Wout])
        c = compact_ref[...]                                   # (Cout, Lout) f32

        # Lane-dense store of the compact intermediate (compute dtype).
        conv_ref[b] = c.astype(conv_ref.dtype)

        # Per-channel batch statistics (no masking: data already compact).
        s = s + jnp.sum(c, axis=1, keepdims=True)
        q = q + jnp.sum(c * c, axis=1, keepdims=True)

    psum_ref[...] = s
    psq_ref[...] = q


# --------------------------------------------------------------------------- #
# Pass 2: folded BN affine + ReLU (lane-dense elementwise sweep)               #
# --------------------------------------------------------------------------- #
def _bn_relu_kernel(conv_ref, scale_ref, offset_ref, o_ref, *, activation):
    """conv_ref (B, Cout, Lout), scale/offset (1, Cout, 1) f32,
    o_ref (B, Cout, Lout)."""
    x = conv_ref[...].astype(jnp.float32)
    y = x * scale_ref[...] + offset_ref[...]
    if activation:
        y = jnp.maximum(y, 0.0)
    o_ref[...] = y.astype(o_ref.dtype)


# --------------------------------------------------------------------------- #
# Sizing helpers                                                               #
# --------------------------------------------------------------------------- #
def _vmem_budget_bytes():
    """Physical-VMEM-aware scoped limit (v5e/v6e: 128 MiB, v7x: 64 MiB)."""
    cap = 64 * 1024 * 1024
    try:
        cap = int(pltpu.get_tpu_info().vmem_capacity_bytes)
    except Exception:
        pass
    # Leave headroom for Mosaic internals: <= ~48 MiB on v7x, <= ~96 MiB else.
    return min((cap * 3) // 4, 96 * 1024 * 1024)


def _pick_images_per_step(n, per_image_bytes, fixed_bytes, budget):
    """Largest divisor of n fitting the VMEM budget, while keeping >= 2 grid
    steps when possible so the batch axis can still be split across the two
    v7x TensorCores (megacore)."""
    min_steps = 2 if n >= 2 else 1
    for d in sorted((d for d in range(1, n + 1) if n % d == 0), reverse=True):
        if n // d < min_steps:
            continue
        if fixed_bytes + d * per_image_bytes <= budget:
            return d
    return 1


# --------------------------------------------------------------------------- #
# Wrapper                                                                      #
# --------------------------------------------------------------------------- #
@functools.partial(jax.jit,
                   static_argnames=("stride", "padding", "eps", "activation",
                                    "compute_dtype", "out_dtype", "im2col"))
def conv_bn_relu(x_nchw, weight_oihw, gamma, beta, *, stride=1, padding=1,
                 eps=1e-5, activation=True, compute_dtype=jnp.bfloat16,
                 out_dtype=jnp.float32, im2col=None):
    """Forward pass of the PyTorch conv_bn_relu module (training-mode BN)."""
    N, Cin, H, W = x_nchw.shape
    Cout, Cin_w, KH, KW = weight_oihw.shape
    assert Cin == Cin_w, "grouped conv not supported"
    # TODO(synk): stride > 1, dilation and groups of nn.Conv2d are not
    # implemented in this Pallas path (would need strided tap windows).
    assert stride == 1, "only stride=1 is implemented"

    Hp, Wp = H + 2 * padding, W + 2 * padding
    Hout, Wout = Hp - KH + 1, Wp - KW + 1
    Lw = Hout * Wp                       # wide extent (incl. per-row overhang)
    Lout = Hout * Wout                   # compact, lane-dense extent (HBM side)
    Lp = Hp * Wp + (KW - 1)              # flattened padded image + tail pad
    K9 = KH * KW * Cin
    if im2col is None:
        # Small Cin: fused-K im2col keeps the MXU fed.  Large Cin: chained
        # accumulating dots avoid pushing K9*Lw scratch stores through the
        # vst port (single on v5e); v7x's MRB accumulates them in place.
        im2col = Cin < 64

    csize = jnp.dtype(compute_dtype).itemsize
    budget = _vmem_budget_bytes()
    per_image = (2 * Cin * Lp * csize              # zf block (double-buffered)
                 + 2 * Cout * Lout * csize         # conv block (double-buffered)
                 + (K9 * Lw * csize if im2col else 0))
    fixed = 2 * Cout * K9 * csize + Cout * Lout * 4 + 8 * Cout * 4
    B = _pick_images_per_step(N, per_image, fixed, budget)
    S = N // B

    # ---- glue (no FLOPs, no duplication): pad + flatten + cast --------------
    xp = jnp.pad(x_nchw,
                 ((0, 0), (0, 0), (padding, padding), (padding, padding)))
    zf = jnp.pad(xp.reshape(N, Cin, Hp * Wp), ((0, 0), (0, 0), (0, KW - 1)))
    zf = zf.astype(compute_dtype)
    wf = jnp.transpose(weight_oihw, (0, 2, 3, 1)).reshape(Cout, K9)
    wf = wf.astype(compute_dtype)

    # ---- pass 1: conv + per-step partial batch statistics -------------------
    scratch = []
    if im2col:
        scratch.append(pltpu.VMEM((K9, B * Lw), compute_dtype))
    scratch.append(pltpu.VMEM((Cout, Lout), jnp.float32))

    conv_c, psum, psq = pl.pallas_call(
        functools.partial(_conv_stats_kernel, KH=KH, KW=KW, Cin=Cin, Wp=Wp,
                          Wout=Wout, Hout=Hout, Lw=Lw, B=B, use_im2col=im2col),
        out_shape=(jax.ShapeDtypeStruct((N, Cout, Lout), compute_dtype),
                   jax.ShapeDtypeStruct((S, Cout, 1), jnp.float32),
                   jax.ShapeDtypeStruct((S, Cout, 1), jnp.float32)),
        grid=(S,),
        in_specs=[
            pl.BlockSpec((B, Cin, Lp), lambda s: (s, 0, 0)),
            pl.BlockSpec((Cout, K9), lambda s: (0, 0)),
        ],
        out_specs=(
            pl.BlockSpec((B, Cout, Lout), lambda s: (s, 0, 0)),
            pl.BlockSpec((None, Cout, 1), lambda s: (s, 0, 0)),
            pl.BlockSpec((None, Cout, 1), lambda s: (s, 0, 0)),
        ),
        scratch_shapes=scratch,
        compiler_params=pltpu.CompilerParams(
            # Per-step partial stats -> every output block is disjoint, so the
            # batch axis is fully parallel (megacore sharding on v7x).
            dimension_semantics=("parallel",),
            vmem_limit_bytes=budget),
    )(zf, wf)

    # ---- BN fold (tiny per-channel math, hoisted out of the kernels) --------
    count = jnp.float32(N * Hout * Wout)
    mean = jnp.sum(psum, axis=0) / count                           # (Cout, 1)
    var = jnp.maximum(jnp.sum(psq, axis=0) / count - mean * mean, 0.0)
    # TODO(synk): E[x^2]-E[x]^2 in f32 can cancel for very large N*H*W with
    # |mean| >> std; a centered second pass would match PyTorch more tightly.
    scale = gamma.astype(jnp.float32).reshape(Cout, 1) * jax.lax.rsqrt(var + eps)
    offset = beta.astype(jnp.float32).reshape(Cout, 1) - mean * scale
    scale3 = scale.reshape(1, Cout, 1)
    offset3 = offset.reshape(1, Cout, 1)

    # ---- pass 2: folded BN affine + ReLU, lane-dense in and out -------------
    out_flat = pl.pallas_call(
        functools.partial(_bn_relu_kernel, activation=activation),
        out_shape=jax.ShapeDtypeStruct((N, Cout, Lout), out_dtype),
        grid=(S,),
        in_specs=[
            pl.BlockSpec((B, Cout, Lout), lambda s: (s, 0, 0)),
            pl.BlockSpec((1, Cout, 1), lambda s: (0, 0, 0)),
            pl.BlockSpec((1, Cout, 1), lambda s: (0, 0, 0)),
        ],
        out_specs=pl.BlockSpec((B, Cout, Lout), lambda s: (s, 0, 0)),
        compiler_params=pltpu.CompilerParams(
            dimension_semantics=("parallel",),
            vmem_limit_bytes=budget),
    )(conv_c, scale3, offset3)

    # Free metadata reshape back to NCHW.
    return out_flat.reshape(N, Cout, Hout, Wout)


# --------------------------------------------------------------------------- #
# Pure-JAX reference (fp32, training-mode BN) for verification                 #
# --------------------------------------------------------------------------- #
def _reference(x, w, gamma, beta, *, stride=1, padding=1, eps=1e-5,
               activation=True):
    conv = jax.lax.conv_general_dilated(
        x, w, window_strides=(stride, stride),
        padding=((padding, padding), (padding, padding)),
        dimension_numbers=("NCHW", "OIHW", "NCHW"),
        precision=jax.lax.Precision.HIGHEST)
    mean = conv.mean(axis=(0, 2, 3), keepdims=True)
    var = ((conv - mean) ** 2).mean(axis=(0, 2, 3), keepdims=True)
    out = (conv - mean) / jnp.sqrt(var + eps)
    out = out * gamma[None, :, None, None] + beta[None, :, None, None]
    if activation:
        out = jnp.maximum(out, 0.0)
    return out


if __name__ == "__main__":
    key = jax.random.PRNGKey(0)
    kx, kw, kx2, kw2 = jax.random.split(key, 4)

    # --- spec-sized test: conv_bn_relu(4, 8, kernel_size=3, padding=1) -------
    N, Cin, H, W = 2, 4, 16, 16
    Cout, KH, KW = 8, 3, 3

    x = jax.random.normal(kx, (N, Cin, H, W), dtype=jnp.float32)
    # nn.Conv2d(4, 8, kernel_size=3, padding=1, bias=False) weight
    weight = 0.1 * jax.random.normal(kw, (Cout, Cin, KH, KW), dtype=jnp.float32)
    # nn.BatchNorm2d(8) default init: weight (gamma) = 1, bias (beta) = 0
    gamma = jnp.ones((Cout,), jnp.float32)
    beta = jnp.zeros((Cout,), jnp.float32)
    # TODO(synk): running_mean/running_var momentum updates (a training-time
    # buffer side effect that does not change the forward output) not modeled.

    ref = _reference(x, weight, gamma, beta)

    # fp32 MXU path: must closely match the fp32 reference.
    out32 = conv_bn_relu(x, weight, gamma, beta, stride=1, padding=1,
                         activation=True, compute_dtype=jnp.float32)
    out32 = jax.block_until_ready(out32)
    assert out32.shape == (N, Cout, H, W)
    err32 = float(jnp.max(jnp.abs(out32 - ref)))
    assert jnp.allclose(out32, ref, atol=5e-3, rtol=5e-3), err32

    # bf16 fast path (bf16 MXU operands + bf16 HBM intermediate, f32 stats).
    outbf = conv_bn_relu(x, weight, gamma, beta, stride=1, padding=1,
                         activation=True, compute_dtype=jnp.bfloat16)
    outbf = jax.block_until_ready(outbf)
    assert outbf.shape == (N, Cout, H, W)
    errbf = float(jnp.max(jnp.abs(outbf - ref)))
    assert jnp.allclose(outbf, ref, atol=5e-2, rtol=5e-2), errbf

    # --- large-Cin layer exercising the tap-accumulate (no-im2col) path ------
    N2, Cin2, H2, W2, Cout2 = 2, 64, 8, 8, 16
    x2 = jax.random.normal(kx2, (N2, Cin2, H2, W2), dtype=jnp.float32)
    w2 = 0.05 * jax.random.normal(kw2, (Cout2, Cin2, KH, KW), dtype=jnp.float32)
    g2 = jnp.ones((Cout2,), jnp.float32)
    b2 = jnp.zeros((Cout2,), jnp.float32)
    ref2 = _reference(x2, w2, g2, b2)
    out2 = conv_bn_relu(x2, w2, g2, b2, stride=1, padding=1, activation=True,
                        compute_dtype=jnp.bfloat16, im2col=False)
    out2 = jax.block_until_ready(out2)
    assert out2.shape == (N2, Cout2, H2, W2)
    err2 = float(jnp.max(jnp.abs(out2 - ref2)))
    assert jnp.allclose(out2, ref2, atol=5e-2, rtol=5e-2), err2

    print("KERNEL_OK")
</pallas_src>

<mosaic_0001>
module attributes {stable_mosaic.version = 11 : i64} {
  func.func @_conv_stats_kernel(%arg0: i32, %arg1: memref<1x4x326xf32, #tpu.memory_space<vmem>>, %arg2: memref<8x36xf32, #tpu.memory_space<vmem>>, %arg3: memref<1x8x256xf32, #tpu.memory_space<vmem>>, %arg4: memref<1x8x1xf32, #tpu.memory_space<vmem>>, %arg5: memref<1x8x1xf32, #tpu.memory_space<vmem>>, %arg6: memref<36x288xf32, #tpu.memory_space<vmem>>, %arg7: memref<8x256xf32, #tpu.memory_space<vmem>>) attributes {dimension_semantics = [#tpu.dimension_semantics<parallel>], iteration_bounds = array<i64: 2>, scalar_prefetch = 0 : i64, scratch_operands = 2 : i64, tpu.core_type = #tpu.core_type<tc>, window_params = [{transform_indices = @transform_0, window_bounds = array<i64: 1, 4, 326>}, {pipeline_mode = #tpu.pipeline_mode<synchronous>, transform_indices = @transform_1, window_bounds = array<i64: 8, 36>}, {transform_indices = @transform_2, window_bounds = array<i64: 1, 8, 256>}, {transform_indices = @transform_3, window_bounds = array<i64: 1, 8, 1>}, {transform_indices = @transform_4, window_bounds = array<i64: 1, 8, 1>}]} {
    %c0 = arith.constant 0 : index
    %c0_0 = arith.constant 0 : index
    %c0_1 = arith.constant 0 : index
    %0 = vector.load %arg1[%c0, %c0_0, %c0_1] : memref<1x4x326xf32, #tpu.memory_space<vmem>>, vector<1x4x288xf32>
    %1 = vector.shape_cast %0 : vector<1x4x288xf32> to vector<4x288xf32>
    %c0_2 = arith.constant 0 : index
    %c0_3 = arith.constant 0 : index
    %2 = vector.load %arg6[%c0_2, %c0_3] : memref<36x288xf32, #tpu.memory_space<vmem>>, vector<4x288xf32>
    tpu.vector_store %arg6[%c0_2, %c0_3], %1 {strides = array<i32>} : memref<36x288xf32, #tpu.memory_space<vmem>>, vector<4x288xf32>,
    %c0_4 = arith.constant 0 : index
    %c0_5 = arith.constant 0 : index
    %c1 = arith.constant 1 : index
    %3 = vector.load %arg1[%c0_4, %c0_5, %c1] : memref<1x4x326xf32, #tpu.memory_space<vmem>>, vector<1x4x288xf32>
    %4 = vector.shape_cast %3 : vector<1x4x288xf32> to vector<4x288xf32>
    %c4 = arith.constant 4 : index
    %c0_6 = arith.constant 0 : index
    %5 = vector.load %arg6[%c4, %c0_6] : memref<36x288xf32, #tpu.memory_space<vmem>>, vector<4x288xf32>
    tpu.vector_store %arg6[%c4, %c0_6], %4 {strides = array<i32>} : memref<36x288xf32, #tpu.memory_space<vmem>>, vector<4x288xf32>,
    %c0_7 = arith.constant 0 : index
    %c0_8 = arith.constant 0 : index
    %c2 = arith.constant 2 : index
    %6 = vector.load %arg1[%c0_7, %c0_8, %c2] : memref<1x4x326xf32, #tpu.memory_space<vmem>>, vector<1x4x288xf32>
    %7 = vector.shape_cast %6 : vector<1x4x288xf32> to vector<4x288xf32>
    %c8 = arith.constant 8 : index
    %c0_9 = arith.constant 0 : index
    %8 = vector.load %arg6[%c8, %c0_9] : memref<36x288xf32, #tpu.memory_space<vmem>>, vector<4x288xf32>
    tpu.vector_store %arg6[%c8, %c0_9], %7 {strides = array<i32>} : memref<36x288xf32, #tpu.memory_space<vmem>>, vector<4x288xf32>,
    %c0_10 = arith.constant 0 : index
    %c0_11 = arith.constant 0 : index
    %c18 = arith.constant 18 : index
    %9 = vector.load %arg1[%c0_10, %c0_11, %c18] : memref<1x4x326xf32, #tpu.memory_space<vmem>>, vector<1x4x288xf32>
    %10 = vector.shape_cast %9 : vector<1x4x288xf32> to vector<4x288xf32>
    %c12 = arith.constant 12 : index
    %c0_12 = arith.constant 0 : index
    %11 = vector.load %arg6[%c12, %c0_12] : memref<36x288xf32, #tpu.memory_space<vmem>>, vector<4x288xf32>
    tpu.vector_store %arg6[%c12, %c0_12], %10 {strides = array<i32>} : memref<36x288xf32, #tpu.memory_space<vmem>>, vector<4x288xf32>,
    %c0_13 = arith.constant 0 : index
    %c0_14 = arith.constant 0 : index
    %c19 = arith.constant 19 : index
    %12 = vector.load %arg1[%c0_13, %c0_14, %c19] : memref<1x4x326xf32, #tpu.memory_space<vmem>>, vector<1x4x288xf32>
    %13 = vector.shape_cast %12 : vector<1x4x288xf32> to vector<4x288xf32>
    %c16 = arith.constant 16 : index
    %c0_15 = arith.constant 0 : index
    %14 = vector.load %arg6[%c16, %c0_15] : memref<36x288xf32, #tpu.memory_space<vmem>>, vector<4x288xf32>
    tpu.vector_store %arg6[%c16, %c0_15], %13 {strides = array<i32>} : memref<36x288xf32, #tpu.memory_space<vmem>>, vector<4x288xf32>,
    %c0_16 = arith.constant 0 : index
    %c0_17 = arith.constant 0 : index
    %c20 = arith.constant 20 : index
    %15 = vector.load %arg1[%c0_16, %c0_17, %c20] : memref<1x4x326xf32, #tpu.memory_space<vmem>>, vector<1x4x288xf32>
    %16 = vector.shape_cast %15 : vector<1x4x288xf32> to vector<4x288xf32>
    %c20_18 = arith.constant 20 : index
    %c0_19 = arith.constant 0 : index
    %17 = vector.load %arg6[%c20_18, %c0_19] : memref<36x288xf32, #tpu.memory_space<vmem>>, vector<4x288xf32>
    tpu.vector_store %arg6[%c20_18, %c0_19], %16 {strides = array<i32>} : memref<36x288xf32, #tpu.memory_space<vmem>>, vector<4x288xf32>,
    %c0_20 = arith.constant 0 : index
    %c0_21 = arith.constant 0 : index
    %c36 = arith.constant 36 : index
    %18 = vector.load %arg1[%c0_20, %c0_21, %c36] : memref<1x4x326xf32, #tpu.memory_space<vmem>>, vector<1x4x288xf32>
    %19 = vector.shape_cast %18 : vector<1x4x288xf32> to vector<4x288xf32>
    %c24 = arith.constant 24 : index
    %c0_22 = arith.constant 0 : index
    %20 = vector.load %arg6[%c24, %c0_22] : memref<36x288xf32, #tpu.memory_space<vmem>>, vector<4x288xf32>
    tpu.vector_store %arg6[%c24, %c0_22], %19 {strides = array<i32>} : memref<36x288xf32, #tpu.memory_space<vmem>>, vector<4x288xf32>,
    %c0_23 = arith.constant 0 : index
    %c0_24 = arith.constant 0 : index
    %c37 = arith.constant 37 : index
    %21 = vector.load %arg1[%c0_23, %c0_24, %c37] : memref<1x4x326xf32, #tpu.memory_space<vmem>>, vector<1x4x288xf32>
    %22 = vector.shape_cast %21 : vector<1x4x288xf32> to vector<4x288xf32>
    %c28 = arith.constant 28 : index
    %c0_25 = arith.constant 0 : index
    %23 = vector.load %arg6[%c28, %c0_25] : memref<36x288xf32, #tpu.memory_space<vmem>>, vector<4x288xf32>
    tpu.vector_store %arg6[%c28, %c0_25], %22 {strides = array<i32>} : memref<36x288xf32, #tpu.memory_space<vmem>>, vector<4x288xf32>,
    %c0_26 = arith.constant 0 : index
    %c0_27 = arith.constant 0 : index
    %c38 = arith.constant 38 : index
    %24 = vector.load %arg1[%c0_26, %c0_27, %c38] : memref<1x4x326xf32, #tpu.memory_space<vmem>>, vector<1x4x288xf32>
    %25 = vector.shape_cast %24 : vector<1x4x288xf32> to vector<4x288xf32>
    %c32 = arith.constant 32 : index
    %c0_28 = arith.constant 0 : index
    %26 = vector.load %arg6[%c32, %c0_28] : memref<36x288xf32, #tpu.memory_space<vmem>>, vector<4x288xf32>
    tpu.vector_store %arg6[%c32, %c0_28], %25 {strides = array<i32>} : memref<36x288xf32, #tpu.memory_space<vmem>>, vector<4x288xf32>,
    %c0_29 = arith.constant 0 : index
    %c0_30 = arith.constant 0 : index
    %27 = vector.load %arg2[%c0_29, %c0_30] : memref<8x36xf32, #tpu.memory_space<vmem>>, vector<8x36xf32>
    %c0_31 = arith.constant 0 : index
    %c0_32 = arith.constant 0 : index
    %28 = vector.load %arg6[%c0_31, %c0_32] : memref<36x288xf32, #tpu.memory_space<vmem>>, vector<36x288xf32>
    %cst = arith.constant dense<0.000000e+00> : vector<8x288xf32>
    %29 = tpu.matmul %27, %28, %cst {dimension_numbers = #tpu.dot_dimension_numbers<[1], [0], [0], [1], [0, 0, 1, 1], [], []>} : vector<8x36xf32>, vector<36x288xf32>, vector<8x288xf32> -> vector<8x288xf32>
    %cst_33 = arith.constant 0.000000e+00 : f32
    %30 = vector.broadcast %cst_33 : f32 to vector<8x1xf32>
    %cst_34 = arith.constant 0.000000e+00 : f32
    %31 = vector.broadcast %cst_34 : f32 to vector<8x1xf32>
    %32 = vector.extract_strided_slice %29 {offsets = [0, 0], sizes = [8, 16], strides = [1, 1]} : vector<8x288xf32> to vector<8x16xf32>
    %c0_35 = arith.constant 0 : index
    %c0_36 = arith.constant 0 : index
    %33 = vector.load %arg7[%c0_35, %c0_36] : memref<8x256xf32, #tpu.memory_space<vmem>>, vector<8x16xf32>
    tpu.vector_store %arg7[%c0_35, %c0_36], %32 {strides = array<i32>} : memref<8x256xf32, #tpu.memory_space<vmem>>, vector<8x16xf32>,
    %34 = vector.extract_strided_slice %29 {offsets = [0, 18], sizes = [8, 16], strides = [1, 1]} : vector<8x288xf32> to vector<8x16xf32>
    %c0_37 = arith.constant 0 : index
    %c16_38 = arith.constant 16 : index
    %35 = vector.load %arg7[%c0_37, %c16_38] : memref<8x256xf32, #tpu.memory_space<vmem>>, vector<8x16xf32>
    tpu.vector_store %arg7[%c0_37, %c16_38], %34 {strides = array<i32>} : memref<8x256xf32, #tpu.memory_space<vmem>>, vector<8x16xf32>,
    %36 = vector.extract_strided_slice %29 {offsets = [0, 36], sizes = [8, 16], strides = [1, 1]} : vector<8x288xf32> to vector<8x16xf32>
    %c0_39 = arith.constant 0 : index
    %c32_40 = arith.constant 32 : index
    %37 = vector.load %arg7[%c0_39, %c32_40] : memref<8x256xf32, #tpu.memory_space<vmem>>, vector<8x16xf32>
    tpu.vector_store %arg7[%c0_39, %c32_40], %36 {strides = array<i32>} : memref<8x256xf32, #tpu.memory_space<vmem>>, vector<8x16xf32>,
    %38 = vector.extract_strided_slice %29 {offsets = [0, 54], sizes = [8, 16], strides = [1, 1]} : vector<8x288xf32> to vector<8x16xf32>
    %c0_41 = arith.constant 0 : index
    %c48 = arith.constant 48 : index
    %39 = vector.load %arg7[%c0_41, %c48] : memref<8x256xf32, #tpu.memory_space<vmem>>, vector<8x16xf32>
    tpu.vector_store %arg7[%c0_41, %c48], %38 {strides = array<i32>} : memref<8x256xf32, #tpu.memory_space<vmem>>, vector<8x16xf32>,
    %40 = vector.extract_strided_slice %29 {offsets = [0, 72], sizes = [8, 16], strides = [1, 1]} : vector<8x288xf32> to vector<8x16xf32>
    %c0_42 = arith.constant 0 : index
    %c64 = arith.constant 64 : index
    %41 = vector.load %arg7[%c0_42, %c64] : memref<8x256xf32, #tpu.memory_space<vmem>>, vector<8x16xf32>
    tpu.vector_store %arg7[%c0_42, %c64], %40 {strides = array<i32>} : memref<8x256xf32, #tpu.memory_space<vmem>>, vector<8x16xf32>,
    %42 = vector.extract_strided_slice %29 {offsets = [0, 90], sizes = [8, 16], strides = [1, 1]} : vector<8x288xf32> to vector<8x16xf32>
    %c0_43 = arith.constant 0 : index
    %c80 = arith.constant 80 : index
    %43 = vector.load %arg7[%c0_43, %c80] : memref<8x256xf32, #tpu.memory_space<vmem>>, vector<8x16xf32>
    tpu.vector_store %arg7[%c0_43, %c80], %42 {strides = array<i32>} : memref<8x256xf32, #tpu.memory_space<vmem>>, vector<8x16xf32>,
    %44 = vector.extract_strided_slice %29 {offsets = [0, 108], sizes = [8, 16], strides = [1, 1]} : vector<8x288xf32> to vector<8x16xf32>
    %c0_44 = arith.constant 0 : index
    %c96 = arith.constant 96 : index
    %45 = vector.load %arg7[%c0_44, %c96] : memref<8x256xf32, #tpu.memory_space<vmem>>, vector<8x16xf32>
    tpu.vector_store %arg7[%c0_44, %c96], %44 {strides = array<i32>} : memref<8x256xf32, #tpu.memory_space<vmem>>, vector<8x16xf32>,
    %46 = vector.extract_strided_slice %29 {offsets = [0, 126], sizes = [8, 16], strides = [1, 1]} : vector<8x288xf32> to vector<8x16xf32>
    %c0_45 = arith.constant 0 : index
    %c112 = arith.constant 112 : index
    %47 = vector.load %arg7[%c0_45, %c112] : memref<8x256xf32, #tpu.memory_space<vmem>>, vector<8x16xf32>
    tpu.vector_store %arg7[%c0_45, %c112], %46 {strides = array<i32>} : memref<8x256xf32, #tpu.memory_space<vmem>>, vector<8x16xf32>,
    %48 = vector.extract_strided_slice %29 {offsets = [0, 144], sizes = [8, 16], strides = [1, 1]} : vector<8x288xf32> to vector<8x16xf32>
    %c0_46 = arith.constant 0 : index
    %c128 = arith.constant 128 : index
    %49 = vector.load %arg7[%c0_46, %c128] : memref<8x256xf32, #tpu.memory_space<vmem>>, vector<8x16xf32>
    tpu.vector_store %arg7[%c0_46, %c128], %48 {strides = array<i32>} : memref<8x256xf32, #tpu.memory_space<vmem>>, vector<8x16xf32>,
    %50 = vector.extract_strided_slice %29 {offsets = [0, 162], sizes = [8, 16], strides = [1, 1]} : vector<8x288xf32> to vector<8x16xf32>
    %c0_47 = arith.constant 0 : index
    %c144 = arith.constant 144 : index
    %51 = vector.load %arg7[%c0_47, %c144] : memref<8x256xf32, #tpu.memory_space<vmem>>, vector<8x16xf32>
    tpu.vector_store %arg7[%c0_47, %c144], %50 {strides = array<i32>} : memref<8x256xf32, #tpu.memory_space<vmem>>, vector<8x16xf32>,
    %52 = vector.extract_strided_slice %29 {offsets = [0, 180], sizes = [8, 16], strides = [1, 1]} : vector<8x288xf32> to vector<8x16xf32>
    %c0_48 = arith.constant 0 : index
    %c160 = arith.constant 160 : index
    %53 = vector.load %arg7[%c0_48, %c160] : memref<8x256xf32, #tpu.memory_space<vmem>>, vector<8x16xf32>
    tpu.vector_store %arg7[%c0_48, %c160], %52 {strides = array<i32>} : memref<8x256xf32, #tpu.memory_space<vmem>>, vector<8x16xf32>,
    %54 = vector.extract_strided_slice %29 {offsets = [0, 198], sizes = [8, 16], strides = [1, 1]} : vector<8x288xf32> to vector<8x16xf32>
    %c0_49 = arith.constant 0 : index
    %c176 = arith.constant 176 : index
    %55 = vector.load %arg7[%c0_49, %c176] : memref<8x256xf32, #tpu.memory_space<vmem>>, vector<8x16xf32>
    tpu.vector_store %arg7[%c0_49, %c176], %54 {strides = array<i32>} : memref<8x256xf32, #tpu.memory_space<vmem>>, vector<8x16xf32>,
    %56 = vector.extract_strided_slice %29 {offsets = [0, 216], sizes = [8, 16], strides = [1, 1]} : vector<8x288xf32> to vector<8x16xf32>
    %c0_50 = arith.constant 0 : index
    %c192 = arith.constant 192 : index
    %57 = vector.load %arg7[%c0_50, %c192] : memref<8x256xf32, #tpu.memory_space<vmem>>, vector<8x16xf32>
    tpu.vector_store %arg7[%c0_50, %c192], %56 {strides = array<i32>} : memref<8x256xf32, #tpu.memory_space<vmem>>, vector<8x16xf32>,
    %58 = vector.extract_strided_slice %29 {offsets = [0, 234], sizes = [8, 16], strides = [1, 1]} : vector<8x288xf32> to vector<8x16xf32>
    %c0_51 = arith.constant 0 : index
    %c208 = arith.constant 208 : index
    %59 = vector.load %arg7[%c0_51, %c208] : memref<8x256xf32, #tpu.memory_space<vmem>>, vector<8x16xf32>
    tpu.vector_store %arg7[%c0_51, %c208], %58 {strides = array<i32>} : memref<8x256xf32, #tpu.memory_space<vmem>>, vector<8x16xf32>,
    %60 = vector.extract_strided_slice %29 {offsets = [0, 252], sizes = [8, 16], strides = [1, 1]} : vector<8x288xf32> to vector<8x16xf32>
    %c0_52 = arith.constant 0 : index
    %c224 = arith.constant 224 : index
    %61 = vector.load %arg7[%c0_52, %c224] : memref<8x256xf32, #tpu.memory_space<vmem>>, vector<8x16xf32>
    tpu.vector_store %arg7[%c0_52, %c224], %60 {strides = array<i32>} : memref<8x256xf32, #tpu.memory_space<vmem>>, vector<8x16xf32>,
    %62 = vector.extract_strided_slice %29 {offsets = [0, 270], sizes = [8, 16], strides = [1, 1]} : vector<8x288xf32> to vector<8x16xf32>
    %c0_53 = arith.constant 0 : index
    %c240 = arith.constant 240 : index
    %63 = vector.load %arg7[%c0_53, %c240] : memref<8x256xf32, #tpu.memory_space<vmem>>, vector<8x16xf32>
    tpu.vector_store %arg7[%c0_53, %c240], %62 {strides = array<i32>} : memref<8x256xf32, #tpu.memory_space<vmem>>, vector<8x16xf32>,
    %c0_54 = arith.constant 0 : index
    %c0_55 = arith.constant 0 : index
    %64 = vector.load %arg7[%c0_54, %c0_55] : memref<8x256xf32, #tpu.memory_space<vmem>>, vector<8x256xf32>
    %c0_56 = arith.constant 0 : index
    %c0_57 = arith.constant 0 : index
    %c0_58 = arith.constant 0 : index
    %65 = vector.load %arg3[%c0_56, %c0_57, %c0_58] : memref<1x8x256xf32, #tpu.memory_space<vmem>>, vector<1x8x256xf32>
    %66 = vector.shape_cast %65 : vector<1x8x256xf32> to vector<8x256xf32>
    %67 = vector.shape_cast %64 : vector<8x256xf32> to vector<1x8x256xf32>
    tpu.vector_store %arg3[%c0_56, %c0_57, %c0_58], %67 {strides = array<i32>} : memref<1x8x256xf32, #tpu.memory_space<vmem>>, vector<1x8x256xf32>,
    %cst_59 = arith.constant dense<0.000000e+00> : vector<8xf32>
    %68 = vector.multi_reduction <add>, %64, %cst_59 [1] : vector<8x256xf32> to vector<8xf32>
    %69 = vector.shape_cast %68 : vector<8xf32> to vector<8x1xf32>
    %70 = arith.addf %30, %69 : vector<8x1xf32>
    %71 = arith.mulf %64, %64 : vector<8x256xf32>
    %cst_60 = arith.constant dense<0.000000e+00> : vector<8xf32>
    %72 = vector.multi_reduction <add>, %71, %cst_60 [1] : vector<8x256xf32> to vector<8xf32>
    %73 = vector.shape_cast %72 : vector<8xf32> to vector<8x1xf32>
    %74 = arith.addf %31, %73 : vector<8x1xf32>
    %c0_61 = arith.constant 0 : index
    %c0_62 = arith.constant 0 : index
    %c0_63 = arith.constant 0 : index
    %75 = vector.load %arg4[%c0_61, %c0_62, %c0_63] : memref<1x8x1xf32, #tpu.memory_space<vmem>>, vector<1x8x1xf32>
    %76 = vector.shape_cast %75 : vector<1x8x1xf32> to vector<8x1xf32>
    %77 = vector.shape_cast %70 : vector<8x1xf32> to vector<1x8x1xf32>
    tpu.vector_store %arg4[%c0_61, %c0_62, %c0_63], %77 {strides = array<i32>} : memref<1x8x1xf32, #tpu.memory_space<vmem>>, vector<1x8x1xf32>,
    %c0_64 = arith.constant 0 : index
    %c0_65 = arith.constant 0 : index
    %c0_66 = arith.constant 0 : index
    %78 = vector.load %arg5[%c0_64, %c0_65, %c0_66] : memref<1x8x1xf32, #tpu.memory_space<vmem>>, vector<1x8x1xf32>
    %79 = vector.shape_cast %78 : vector<1x8x1xf32> to vector<8x1xf32>
    %80 = vector.shape_cast %74 : vector<8x1xf32> to vector<1x8x1xf32>
    tpu.vector_store %arg5[%c0_64, %c0_65, %c0_66], %80 {strides = array<i32>} : memref<1x8x1xf32, #tpu.memory_space<vmem>>, vector<1x8x1xf32>,
    return
  }
  func.func @transform_0(%arg0: i32) -> (i32, i32, i32) {
    %c0_i32 = arith.constant 0 : i32
    %c0_i32_0 = arith.constant 0 : i32
    %c0_i32_1 = arith.constant 0 : i32
    return %arg0, %c0_i32, %c0_i32_0 : i32, i32, i32
  }
  func.func @transform_1(%arg0: i32) -> (i32, i32) {
    %c0_i32 = arith.constant 0 : i32
    %c0_i32_0 = arith.constant 0 : i32
    %c0_i32_1 = arith.constant 0 : i32
    return %c0_i32, %c0_i32_0 : i32, i32
  }
  func.func @transform_2(%arg0: i32) -> (i32, i32, i32) {
    %c0_i32 = arith.constant 0 : i32
    %c0_i32_0 = arith.constant 0 : i32
    %c0_i32_1 = arith.constant 0 : i32
    return %arg0, %c0_i32, %c0_i32_0 : i32, i32, i32
  }
  func.func @transform_3(%arg0: i32) -> (i32, i32, i32) {
    %c0_i32 = arith.constant 0 : i32
    %c0_i32_0 = arith.constant 0 : i32
    %c0_i32_1 = arith.constant 0 : i32
    return %arg0, %c0_i32, %c0_i32_0 : i32, i32, i32
  }
  func.func @transform_4(%arg0: i32) -> (i32, i32, i32) {
    %c0_i32 = arith.constant 0 : i32
    %c0_i32_0 = arith.constant 0 : i32
    %c0_i32_1 = arith.constant 0 : i32
    return %arg0, %c0_i32, %c0_i32_0 : i32, i32, i32
  }
}

module attributes {stable_mosaic.version = 11 : i64} {
  func.func @_bn_relu_kernel(%arg0: i32, %arg1: memref<1x8x256xf32, #tpu.memory_space<vmem>>, %arg2: memref<1x8x1xf32, #tpu.memory_space<vmem>>, %arg3: memref<1x8x1xf32, #tpu.memory_space<vmem>>, %arg4: memref<1x8x256xf32, #tpu.memory_space<vmem>>) attributes {dimension_semantics = [#tpu.dimension_semantics<parallel>], iteration_bounds = array<i64: 2>, scalar_prefetch = 0 : i64, scratch_operands = 0 : i64, tpu.core_type = #tpu.core_type<tc>, window_params = [{transform_indices = @transform_0, window_bounds = array<i64: 1, 8, 256>}, {pipeline_mode = #tpu.pipeline_mode<synchronous>, transform_indices = @transform_1, window_bounds = array<i64: 1, 8, 1>}, {pipeline_mode = #tpu.pipeline_mode<synchronous>, transform_indices = @transform_2, window_bounds = array<i64: 1, 8, 1>}, {transform_indices = @transform_3, window_bounds = array<i64: 1, 8, 256>}]} {
    %c0 = arith.constant 0 : index
    %c0_0 = arith.constant 0 : index
    %c0_1 = arith.constant 0 : index
    %0 = vector.load %arg1[%c0, %c0_0, %c0_1] : memref<1x8x256xf32, #tpu.memory_space<vmem>>, vector<1x8x256xf32>
    %c0_2 = arith.constant 0 : index
    %c0_3 = arith.constant 0 : index
    %c0_4 = arith.constant 0 : index
    %1 = vector.load %arg2[%c0_2, %c0_3, %c0_4] : memref<1x8x1xf32, #tpu.memory_space<vmem>>, vector<1x8x1xf32>
    %2 = vector.broadcast %1 : vector<1x8x1xf32> to vector<1x8x256xf32>
    %3 = arith.mulf %0, %2 : vector<1x8x256xf32>
    %c0_5 = arith.constant 0 : index
    %c0_6 = arith.constant 0 : index
    %c0_7 = arith.constant 0 : index
    %4 = vector.load %arg3[%c0_5, %c0_6, %c0_7] : memref<1x8x1xf32, #tpu.memory_space<vmem>>, vector<1x8x1xf32>
    %5 = vector.broadcast %4 : vector<1x8x1xf32> to vector<1x8x256xf32>
    %6 = arith.addf %3, %5 : vector<1x8x256xf32>
    %cst = arith.constant 0.000000e+00 : f32
    %7 = vector.broadcast %cst : f32 to vector<1x8x256xf32>
    %8 = arith.maximumf %6, %7 : vector<1x8x256xf32>
    %c0_8 = arith.constant 0 : index
    %c0_9 = arith.constant 0 : index
    %c0_10 = arith.constant 0 : index
    %9 = vector.load %arg4[%c0_8, %c0_9, %c0_10] : memref<1x8x256xf32, #tpu.memory_space<vmem>>, vector<1x8x256xf32>
    tpu.vector_store %arg4[%c0_8, %c0_9, %c0_10], %8 {strides = array<i32>} : memref<1x8x256xf32, #tpu.memory_space<vmem>>, vector<1x8x256xf32>,
    return
  }
  func.func @transform_0(%arg0: i32) -> (i32, i32, i32) {
    %c0_i32 = arith.constant 0 : i32
    %c0_i32_0 = arith.constant 0 : i32
    %c0_i32_1 = arith.constant 0 : i32
    return %arg0, %c0_i32, %c0_i32_0 : i32, i32, i32
  }
  func.func @transform_1(%arg0: i32) -> (i32, i32, i32) {
    %c0_i32 = arith.constant 0 : i32
    %c0_i32_0 = arith.constant 0 : i32
    %c0_i32_1 = arith.constant 0 : i32
    %c0_i32_2 = arith.constant 0 : i32
    return %c0_i32, %c0_i32_0, %c0_i32_1 : i32, i32, i32
  }
  func.func @transform_2(%arg0: i32) -> (i32, i32, i32) {
    %c0_i32 = arith.constant 0 : i32
    %c0_i32_0 = arith.constant 0 : i32
    %c0_i32_1 = arith.constant 0 : i32
    %c0_i32_2 = arith.constant 0 : i32
    return %c0_i32, %c0_i32_0, %c0_i32_1 : i32, i32, i32
  }
  func.func @transform_3(%arg0: i32) -> (i32, i32, i32) {
    %c0_i32 = arith.constant 0 : i32
    %c0_i32_0 = arith.constant 0 : i32
    %c0_i32_1 = arith.constant 0 : i32
    return %arg0, %c0_i32, %c0_i32_0 : i32, i32, i32
  }
}

</mosaic_0001>

<llo_original>
// kernel: conv_bn_relu.3
$region0: #{conv_bn_relu.3}
  #allocation0 [shape = 'u32[]', space=smem, size = 0x4, offset = 0x4, fixed_abs, tag = 'smem constant byte address 0x4 - core index']
  #allocation1 [shape = 'u32[72,128]{1,0:T(1,128)}', space=vmem, size = 0x9000, scoped, tag = 'internal scratch']
  %s0 = inlined_call_operand.vmem [shape: f32[2,8,256], index: 0, kind: input, shape index: {}]
  %s1 = inlined_call_operand.vmem [shape: f32[1,8,1], index: 1, kind: input, shape index: {}]
  %s2 = inlined_call_operand.vmem [shape: f32[1,8,1], index: 2, kind: input, shape index: {}]
  %s3 = inlined_call_operand.vmem [shape: f32[2,8,256], index: 3, kind: output, shape index: {}]
  %s4 = sld [smem:[#allocation0]]
  $region45: #{conv_bn_relu.3} parent=0
    _
  %s6 = ssub.s32 1, %s4
  %s7 = scalar_select 0, %s6, %s4
  loop: start=0, step=1, limit=4
  $region2: #{conv_bn_relu.3} parent=0 // loop_pre_header
    _
  $region3: #{conv_bn_relu.3} parent=0 // loop_header
    %s9 = sphi 0, %s13
    %p10 = scmp.ge.s32.totalorder %s9, 4
    %s19 = sphi 0, %s21
    %s22 = sphi 0, %s19
    %s23 = sphi 0, %s22
    %s39 = sphi 0, %s23
    %s43 = sphi 0, %s43
    %s45 = sphi 0, %s43
    %s46 = sphi 0, %s45
    %s60 = sphi 0, %s46
    %s64 = sphi 0, %s64
    %s66 = sphi 0, %s64
    %s67 = sphi 0, %s66
    %s81 = sphi 0, %s67
    %s87 = sphi 0, %s89
    %s90 = sphi 0, %s87
    %s91 = sphi 0, %s90
    %s107 = sphi 0, %s91
  $region4: #{conv_bn_relu.3} parent=0 // loop_header_branch
    %12 = sbr.rel (%p10) target = $region8
  $region5: #{conv_bn_relu.3} parent=0 // loop_body
    %s14 = ssub.s32 %s9, 1
    %s15 = ssub.s32 %s9, 2
    %s16 = sadd.s32 %s9, 1
    %s17 = ssub.s32 %s9, %s16
    %p18 = scmp.eq.s32.totalorder %s17, 0
    %s20 = sadd.s32 %s19, 1
    %s21 = scalar_select %p18, %s19, %s20
    %p24 = pneg %p18
    %p25 = scmp.eq.s32.totalorder %s9, 1
    %p26 = por %p24, %p25
    %p27 = scmp.ne.s32.totalorder %s19, %s22
    %p28 = scmp.eq.s32.totalorder %s9, 0
    %p29 = por %p27, %p28
    %p30 = scmp.ne.s32.totalorder %s19, %s22
    %p31 = scmp.eq.s32.totalorder %s14, 1
    %p32 = por %p30, %p31
    %p33 = scmp.ne.s32.totalorder %s22, %s23
    %p34 = scmp.eq.s32.totalorder %s14, 0
    %p35 = por %p33, %p34
    %p36 = scmp.ne.s32.totalorder %s22, %s23
    %p37 = scmp.eq.s32.totalorder %s15, 1
    %p38 = por %p36, %p37
    %p40 = scmp.ne.s32.totalorder %s23, %s39
    %p41 = scmp.eq.s32.totalorder %s15, 0
    %p42 = por %p40, %p41
    %s44 = sadd.s32 %s43, 1
    %p47 = scmp.eq.s32.totalorder %s9, 1
    %p48 = scmp.ne.s32.totalorder %s43, %s45
    %p49 = scmp.eq.s32.totalorder %s9, 0
    %p50 = por %p48, %p49
    %p51 = scmp.ne.s32.totalorder %s43, %s45
    %p52 = scmp.eq.s32.totalorder %s14, 1
    %p53 = por %p51, %p52
    %p54 = scmp.ne.s32.totalorder %s45, %s46
    %p55 = scmp.eq.s32.totalorder %s14, 0
    %p56 = por %p54, %p55
    %p57 = scmp.ne.s32.totalorder %s45, %s46
    %p58 = scmp.eq.s32.totalorder %s15, 1
    %p59 = por %p57, %p58
    %p61 = scmp.ne.s32.totalorder %s46, %s60
    %p62 = scmp.eq.s32.totalorder %s15, 0
    %p63 = por %p61, %p62
    %s65 = sadd.s32 %s64, 1
    %p68 = scmp.eq.s32.totalorder %s9, 1
    %p69 = scmp.ne.s32.totalorder %s64, %s66
    %p70 = scmp.eq.s32.totalorder %s9, 0
    %p71 = por %p69, %p70
    %p72 = scmp.ne.s32.totalorder %s64, %s66
    %p73 = scmp.eq.s32.totalorder %s14, 1
    %p74 = por %p72, %p73
    %p75 = scmp.ne.s32.totalorder %s66, %s67
    %p76 = scmp.eq.s32.totalorder %s14, 0
    %p77 = por %p75, %p76
    %p78 = scmp.ne.s32.totalorder %s66, %s67
    %p79 = scmp.eq.s32.totalorder %s15, 1
    %p80 = por %p78, %p79
    %p82 = scmp.ne.s32.totalorder %s67, %s81
    %p83 = scmp.eq.s32.totalorder %s15, 0
    %p84 = por %p82, %p83
    %s85 = ssub.s32 %s9, %s16
    %p86 = scmp.eq.s32.totalorder %s85, 0
    %s88 = sadd.s32 %s87, 1
    %s89 = scalar_select %p86, %s87, %s88
    %p92 = pneg %p86
    %p93 = scmp.eq.s32.totalorder %s9, 1
    %p94 = por %p92, %p93
    %p95 = scmp.ne.s32.totalorder %s87, %s90
    %p96 = scmp.eq.s32.totalorder %s9, 0
    %p97 = por %p95, %p96
    %p98 = scmp.ne.s32.totalorder %s87, %s90
    %p99 = scmp.eq.s32.totalorder %s14, 1
    %p100 = por %p98, %p99
    %p101 = scmp.ne.s32.totalorder %s90, %s91
    %p102 = scmp.eq.s32.totalorder %s14, 0
    %p103 = por %p101, %p102
    %p104 = scmp.ne.s32.totalorder %s90, %s91
    %p105 = scmp.eq.s32.totalorder %s15, 1
    %p106 = por %p104, %p105
    %p108 = scmp.ne.s32.totalorder %s91, %s107
    %p109 = scmp.eq.s32.totalorder %s15, 0
    %p110 = por %p108, %p109
    %p111 = scmp.le.s32.totalorder 1, %s9
    %p112 = scmp.lt.s32.totalorder %s9, 3
    %p113 = pnand %p111, %p112
    %p114 = pneg %p113
    // Predicated region
    $region9: #{conv_bn_relu.3} parent=5 // pred_check
      _
    $region10: #{conv_bn_relu.3} parent=5 // pred_check_branch
      %116 = sbr.rel (%p113) target = $region12
    $region11: #{conv_bn_relu.3} parent=5 // pred_region
      %s117 = ssub.s32 %s9, 1
      // Predicated region
      $region13: #{conv_bn_relu.3} parent=11 // pred_check
        %p118 = pneg %p56
      $region14: #{conv_bn_relu.3} parent=11 // pred_check_branch
        %120 = sbr.rel (%p118) target = $region16
      $region15: #{conv_bn_relu.3} parent=11 // pred_region
        _
      $region16: #{conv_bn_relu.3} parent=11 // pred_fallthru
        _
      // Predicated region
      $region17: #{conv_bn_relu.3} parent=11 // pred_check
        %p121 = pneg %p77
      $region18: #{conv_bn_relu.3} parent=11 // pred_check_branch
        %123 = sbr.rel (%p121) target = $region20
      $region19: #{conv_bn_relu.3} parent=11 // pred_region
        _
      $region20: #{conv_bn_relu.3} parent=11 // pred_fallthru
        _
    $region12: #{conv_bn_relu.3} parent=5 // pred_fallthru
      _
    %p124 = scmp.lt.s32.totalorder %s9, 2
    // Predicated region
    $region21: #{conv_bn_relu.3} parent=5 // pred_check
      %p125 = pneg %p124
    $region22: #{conv_bn_relu.3} parent=5 // pred_check_branch
      %127 = sbr.rel (%p125) target = $region24
    $region23: #{conv_bn_relu.3} parent=5 // pred_region
      // Predicated region
      $region25: #{conv_bn_relu.3} parent=23 // pred_check
        %p128 = pneg %p29
      $region26: #{conv_bn_relu.3} parent=23 // pred_check_branch
        %130 = sbr.rel (%p128) target = $region28
      $region27: #{conv_bn_relu.3} parent=23 // pred_region
        %p131 = scmp.lt.s32.totalorder %s9, 1
        %s132 = scalar_select %p131, %s9, 1
        %s133 = smul.addr %s132, 2
        %s134 = smul.addr %s133, 8
        %s135 = scalar_lea.vmem %s0, %s134
      $region28: #{conv_bn_relu.3} parent=23 // pred_fallthru
        _
    $region24: #{conv_bn_relu.3} parent=5 // pred_fallthru
      _
    %p136 = scmp.le.s32.totalorder 1, %s9
    %p137 = scmp.lt.s32.totalorder %s9, 3
    %p138 = pnand %p136, %p137
    %p139 = pneg %p138
    // Predicated region
    $region29: #{conv_bn_relu.3} parent=5 // pred_check
      _
    $region30: #{conv_bn_relu.3} parent=5 // pred_check_branch
      %141 = sbr.rel (%p138) target = $region32
    $region31: #{conv_bn_relu.3} parent=5 // pred_region
      %s142 = ssub.s32 %s9, 1
      %p143 = scmp.lt.s32.totalorder %s14, 1
      %s144 = scalar_select %p143, %s14, 1
      %s145 = smul.addr %s144, 2
      %s146 = smul.addr %s145, 8
      %s147 = scalar_lea.vmem %s0, %s146
      %p148 = pneg %p35
      %p149 = pneg %p32
      %p150 = pneg %p56
      %p151 = pneg %p53
      %p152 = pneg %p77
      %p153 = pneg %p74
      %p154 = pneg %p103
      %p155 = pneg %p100
      %p156 = scmp.lt.s32.totalorder %s14, 1
      %s157 = scalar_select %p156, %s14, 1
      %s158 = smul.addr %s157, 2
      %s159 = smul.addr %s158, 8
      %s160 = scalar_lea.vmem %s3, %s159
      %p161 = scmp.lt.s32.totalorder %s14, 1
      %s162 = scalar_select %p161, %s14, 1
      %s163 = smul.addr %s162, 2
      %s164 = smul.addr %s163, 8
      %s165 = scalar_lea.vmem %s0, %s164
      %p166 = scmp.lt.s32.totalorder %s14, 1
      %s167 = scalar_select %p166, %s14, 1
      %s168 = smul.addr %s167, 2
      %s169 = smul.addr %s168, 8
      %s170 = scalar_lea.vmem %s3, %s169
      %v171 = vld [vmem:[%s165] sm:$0xff]
      %v172 = vld [vmem:[%s165 + $0x8] sm:$0xff]
      %v173 = vld [vmem:[%s1] sm:$0xff]
      %175 = vset.pattern.permute.xlu0 0
      %176 = vperm.xlu0 %175, %v173
      %v177 = vpop.permute.xlu0 %176
      %v179 = vmul.f32 %v171, %v177
      %v180 = vmul.f32 %v172, %v177
      %v181 = vld [vmem:[%s2] sm:$0xff]
      %183 = vset.pattern.permute.xlu0 0
      %184 = vperm.xlu0 %183, %v181
      %v185 = vpop.permute.xlu0 %184
      %v187 = vadd.f32 %v179, %v185
      %v188 = vadd.f32 %v180, %v185
      %v189 = vmax.f32 %v187, 0.0
      %v190 = vmax.f32 %v188, 0.0
      %191 = vst [vmem:[%s170] sm:$0xff] %v189
      %192 = vst [vmem:[%s170 + $0x8] sm:$0xff] %v190
      %p193 = scmp.lt.s32.totalorder %s14, 1
      %s194 = scalar_select %p193, %s14, 1
      %s195 = smul.addr %s194, 2
      %s196 = smul.addr %s195, 8
      %s197 = scalar_lea.vmem %s3, %s196
      // Predicated region
      $region33: #{conv_bn_relu.3} parent=31 // pred_check
        %p198 = pneg %p100
      $region34: #{conv_bn_relu.3} parent=31 // pred_check_branch
        %200 = sbr.rel (%p198) target = $region36
      $region35: #{conv_bn_relu.3} parent=31 // pred_region
        _
      $region36: #{conv_bn_relu.3} parent=31 // pred_fallthru
        _
    $region32: #{conv_bn_relu.3} parent=5 // pred_fallthru
      _
    %p201 = scmp.le.s32.totalorder 2, %s9
    // Predicated region
    $region37: #{conv_bn_relu.3} parent=5 // pred_check
      %p202 = pneg %p201
    $region38: #{conv_bn_relu.3} parent=5 // pred_check_branch
      %204 = sbr.rel (%p202) target = $region40
    $region39: #{conv_bn_relu.3} parent=5 // pred_region
      %s205 = ssub.s32 %s9, 2
      // Predicated region
      $region41: #{conv_bn_relu.3} parent=39 // pred_check
        %p206 = pneg %p106
      $region42: #{conv_bn_relu.3} parent=39 // pred_check_branch
        %208 = sbr.rel (%p206) target = $region44
      $region43: #{conv_bn_relu.3} parent=39 // pred_region
        %p209 = scmp.lt.s32.totalorder %s15, 1
        %s210 = scalar_select %p209, %s15, 1
        %s211 = smul.addr %s210, 2
        %s212 = smul.addr %s211, 8
        %s213 = scalar_lea.vmem %s3, %s212
      $region44: #{conv_bn_relu.3} parent=39 // pred_fallthru
        _
    $region40: #{conv_bn_relu.3} parent=5 // pred_fallthru
      _
  $region6: #{conv_bn_relu.3} parent=0 // loop_footer
    %s13 = sadd.s32 1, %s9
  $region7: #{conv_bn_relu.3} parent=0 // loop_footer_branch
    %8 = sbr.rel target = $region3
  $region8: #{conv_bn_relu.3} parent=0 // loop_exit
    _

// kernel: conv_bn_relu.2
$region0: #{conv_bn_relu.2}
  #allocation0 [shape = 'u32[]', space=smem, size = 0x4, offset = 0x4, fixed_abs, tag = 'smem constant byte address 0x4 - core index']
  #allocation1 [shape = 'u32[72,128]{1,0:T(1,128)}', space=vmem, size = 0x9000, scoped, tag = 'internal scratch']
  #allocation2 [shape = 'f32[36,288]{1,0:T(8,128)}', space=vmem, size = 0xf000, scoped, tag = 'scratch operand']
  #allocation3 [shape = 'f32[8,256]{1,0:T(8,128)}', space=vmem, size = 0x2000, scoped, tag = 'scratch operand']
  %s0 = inlined_call_operand.vmem [shape: f32[2,4,326], index: 0, kind: input, shape index: {}]
  %s1 = inlined_call_operand.vmem [shape: f32[8,36], index: 1, kind: input, shape index: {}]
  %s2 = inlined_call_operand.vmem [shape: f32[2,8,256], index: 2, kind: output, shape index: {0}]
  %s3 = inlined_call_operand.vmem [shape: f32[2,8,1], index: 3, kind: output, shape index: {1}]
  %s4 = inlined_call_operand.vmem [shape: f32[2,8,1], index: 4, kind: output, shape index: {2}]
  %5 = xla_tuple %s2, %s3, %s4
  %s6 = sld [smem:[#allocation0]]
  $region57: #{conv_bn_relu.2} parent=0
    _
  %s8 = ssub.s32 1, %s6
  %s9 = scalar_select 0, %s8, %s6
  loop: start=0, step=1, limit=4
  $region2: #{conv_bn_relu.2} parent=0 // loop_pre_header
    _
  $region3: #{conv_bn_relu.2} parent=0 // loop_header
    %s11 = sphi 0, %s15
    %p12 = scmp.ge.s32.totalorder %s11, 4
    %s21 = sphi 0, %s23
    %s24 = sphi 0, %s21
    %s25 = sphi 0, %s24
    %s41 = sphi 0, %s25
    %s45 = sphi 0, %s45
    %s47 = sphi 0, %s45
    %s48 = sphi 0, %s47
    %s62 = sphi 0, %s48
    %s68 = sphi 0, %s70
    %s71 = sphi 0, %s68
    %s72 = sphi 0, %s71
    %s88 = sphi 0, %s72
    %s94 = sphi 0, %s96
    %s97 = sphi 0, %s94
    %s98 = sphi 0, %s97
    %s114 = sphi 0, %s98
    %s120 = sphi 0, %s122
    %s123 = sphi 0, %s120
    %s124 = sphi 0, %s123
    %s140 = sphi 0, %s124
  $region4: #{conv_bn_relu.2} parent=0 // loop_header_branch
    %14 = sbr.rel (%p12) target = $region8
  $region5: #{conv_bn_relu.2} parent=0 // loop_body
    %s16 = ssub.s32 %s11, 1
    %s17 = ssub.s32 %s11, 2
    %s18 = sadd.s32 %s11, 1
    %s19 = ssub.s32 %s11, %s18
    %p20 = scmp.eq.s32.totalorder %s19, 0
    %s22 = sadd.s32 %s21, 1
    %s23 = scalar_select %p20, %s21, %s22
    %p26 = pneg %p20
    %p27 = scmp.eq.s32.totalorder %s11, 1
    %p28 = por %p26, %p27
    %p29 = scmp.ne.s32.totalorder %s21, %s24
    %p30 = scmp.eq.s32.totalorder %s11, 0
    %p31 = por %p29, %p30
    %p32 = scmp.ne.s32.totalorder %s21, %s24
    %p33 = scmp.eq.s32.totalorder %s16, 1
    %p34 = por %p32, %p33
    %p35 = scmp.ne.s32.totalorder %s24, %s25
    %p36 = scmp.eq.s32.totalorder %s16, 0
    %p37 = por %p35, %p36
    %p38 = scmp.ne.s32.totalorder %s24, %s25
    %p39 = scmp.eq.s32.totalorder %s17, 1
    %p40 = por %p38, %p39
    %p42 = scmp.ne.s32.totalorder %s25, %s41
    %p43 = scmp.eq.s32.totalorder %s17, 0
    %p44 = por %p42, %p43
    %s46 = sadd.s32 %s45, 1
    %p49 = scmp.eq.s32.totalorder %s11, 1
    %p50 = scmp.ne.s32.totalorder %s45, %s47
    %p51 = scmp.eq.s32.totalorder %s11, 0
    %p52 = por %p50, %p51
    %p53 = scmp.ne.s32.totalorder %s45, %s47
    %p54 = scmp.eq.s32.totalorder %s16, 1
    %p55 = por %p53, %p54
    %p56 = scmp.ne.s32.totalorder %s47, %s48
    %p57 = scmp.eq.s32.totalorder %s16, 0
    %p58 = por %p56, %p57
    %p59 = scmp.ne.s32.totalorder %s47, %s48
    %p60 = scmp.eq.s32.totalorder %s17, 1
    %p61 = por %p59, %p60
    %p63 = scmp.ne.s32.totalorder %s48, %s62
    %p64 = scmp.eq.s32.totalorder %s17, 0
    %p65 = por %p63, %p64
    %s66 = ssub.s32 %s11, %s18
    %p67 = scmp.eq.s32.totalorder %s66, 0
    %s69 = sadd.s32 %s68, 1
    %s70 = scalar_select %p67, %s68, %s69
    %p73 = pneg %p67
    %p74 = scmp.eq.s32.totalorder %s11, 1
    %p75 = por %p73, %p74
    %p76 = scmp.ne.s32.totalorder %s68, %s71
    %p77 = scmp.eq.s32.totalorder %s11, 0
    %p78 = por %p76, %p77
    %p79 = scmp.ne.s32.totalorder %s68, %s71
    %p80 = scmp.eq.s32.totalorder %s16, 1
    %p81 = por %p79, %p80
    %p82 = scmp.ne.s32.totalorder %s71, %s72
    %p83 = scmp.eq.s32.totalorder %s16, 0
    %p84 = por %p82, %p83
    %p85 = scmp.ne.s32.totalorder %s71, %s72
    %p86 = scmp.eq.s32.totalorder %s17, 1
    %p87 = por %p85, %p86
    %p89 = scmp.ne.s32.totalorder %s72, %s88
    %p90 = scmp.eq.s32.totalorder %s17, 0
    %p91 = por %p89, %p90
    %s92 = ssub.s32 %s11, %s18
    %p93 = scmp.eq.s32.totalorder %s92, 0
    %s95 = sadd.s32 %s94, 1
    %s96 = scalar_select %p93, %s94, %s95
    %p99 = pneg %p93
    %p100 = scmp.eq.s32.totalorder %s11, 1
    %p101 = por %p99, %p100
    %p102 = scmp.ne.s32.totalorder %s94, %s97
    %p103 = scmp.eq.s32.totalorder %s11, 0
    %p104 = por %p102, %p103
    %p105 = scmp.ne.s32.totalorder %s94, %s97
    %p106 = scmp.eq.s32.totalorder %s16, 1
    %p107 = por %p105, %p106
    %p108 = scmp.ne.s32.totalorder %s97, %s98
    %p109 = scmp.eq.s32.totalorder %s16, 0
    %p110 = por %p108, %p109
    %p111 = scmp.ne.s32.totalorder %s97, %s98
    %p112 = scmp.eq.s32.totalorder %s17, 1
    %p113 = por %p111, %p112
    %p115 = scmp.ne.s32.totalorder %s98, %s114
    %p116 = scmp.eq.s32.totalorder %s17, 0
    %p117 = por %p115, %p116
    %s118 = ssub.s32 %s11, %s18
    %p119 = scmp.eq.s32.totalorder %s118, 0
    %s121 = sadd.s32 %s120, 1
    %s122 = scalar_select %p119, %s120, %s121
    %p125 = pneg %p119
    %p126 = scmp.eq.s32.totalorder %s11, 1
    %p127 = por %p125, %p126
    %p128 = scmp.ne.s32.totalorder %s120, %s123
    %p129 = scmp.eq.s32.totalorder %s11, 0
    %p130 = por %p128, %p129
    %p131 = scmp.ne.s32.totalorder %s120, %s123
    %p132 = scmp.eq.s32.totalorder %s16, 1
    %p133 = por %p131, %p132
    %p134 = scmp.ne.s32.totalorder %s123, %s124
    %p135 = scmp.eq.s32.totalorder %s16, 0
    %p136 = por %p134, %p135
    %p137 = scmp.ne.s32.totalorder %s123, %s124
    %p138 = scmp.eq.s32.totalorder %s17, 1
    %p139 = por %p137, %p138
    %p141 = scmp.ne.s32.totalorder %s124, %s140
    %p142 = scmp.eq.s32.totalorder %s17, 0
    %p143 = por %p141, %p142
    %p144 = scmp.le.s32.totalorder 1, %s11
    %p145 = scmp.lt.s32.totalorder %s11, 3
    %p146 = pnand %p144, %p145
    %p147 = pneg %p146
    // Predicated region
    $region9: #{conv_bn_relu.2} parent=5 // pred_check
      _
    $region10: #{conv_bn_relu.2} parent=5 // pred_check_branch
      %149 = sbr.rel (%p146) target = $region12
    $region11: #{conv_bn_relu.2} parent=5 // pred_region
      %s150 = ssub.s32 %s11, 1
      // Predicated region
      $region13: #{conv_bn_relu.2} parent=11 // pred_check
        %p151 = pneg %p58
      $region14: #{conv_bn_relu.2} parent=11 // pred_check_branch
        %153 = sbr.rel (%p151) target = $region16
      $region15: #{conv_bn_relu.2} parent=11 // pred_region
        _
      $region16: #{conv_bn_relu.2} parent=11 // pred_fallthru
        _
    $region12: #{conv_bn_relu.2} parent=5 // pred_fallthru
      _
    %p154 = scmp.lt.s32.totalorder %s11, 2
    // Predicated region
    $region17: #{conv_bn_relu.2} parent=5 // pred_check
      %p155 = pneg %p154
    $region18: #{conv_bn_relu.2} parent=5 // pred_check_branch
      %157 = sbr.rel (%p155) target = $region20
    $region19: #{conv_bn_relu.2} parent=5 // pred_region
      // Predicated region
      $region21: #{conv_bn_relu.2} parent=19 // pred_check
        %p158 = pneg %p31
      $region22: #{conv_bn_relu.2} parent=19 // pred_check_branch
        %160 = sbr.rel (%p158) target = $region24
      $region23: #{conv_bn_relu.2} parent=19 // pred_region
        %p161 = scmp.lt.s32.totalorder %s11, 1
        %s162 = scalar_select %p161, %s11, 1
        %s163 = smul.addr %s162, 3
        %s164 = smul.addr %s163, 4
        %s165 = scalar_lea.vmem %s0, %s164
      $region24: #{conv_bn_relu.2} parent=19 // pred_fallthru
        _
    $region20: #{conv_bn_relu.2} parent=5 // pred_fallthru
      _
    %p166 = scmp.le.s32.totalorder 1, %s11
    %p167 = scmp.lt.s32.totalorder %s11, 3
    %p168 = pnand %p166, %p167
    %p169 = pneg %p168
    // Predicated region
    $region25: #{conv_bn_relu.2} parent=5 // pred_check
      _
    $region26: #{conv_bn_relu.2} parent=5 // pred_check_branch
      %171 = sbr.rel (%p168) target = $region28
    $region27: #{conv_bn_relu.2} parent=5 // pred_region
      %s172 = ssub.s32 %s11, 1
      %p173 = scmp.lt.s32.totalorder %s16, 1
      %s174 = scalar_select %p173, %s16, 1
      %s175 = smul.addr %s174, 3
      %s176 = smul.addr %s175, 4
      %s177 = scalar_lea.vmem %s0, %s176
      %p178 = pneg %p37
      %p179 = pneg %p34
      %p180 = pneg %p58
      %p181 = pneg %p55
      %p182 = pneg %p84
      %p183 = pneg %p81
      %p184 = scmp.lt.s32.totalorder %s16, 1
      %s185 = scalar_select %p184, %s16, 1
      %s186 = smul.addr %s185, 2
      %s187 = smul.addr %s186, 8
      %s188 = scalar_lea.vmem %s2, %s187
      %p189 = pneg %p110
      %p190 = pneg %p107
      %p191 = scmp.lt.s32.totalorder %s16, 1
      %s192 = scalar_select %p191, %s16, 1
      %s193 = smul.addr %s192, 8
      %s194 = scalar_lea.vmem %s3, %s193
      %p195 = pneg %p136
      %p196 = pneg %p133
      %p197 = scmp.lt.s32.totalorder %s16, 1
      %s198 = scalar_select %p197, %s16, 1
      %s199 = smul.addr %s198, 8
      %s200 = scalar_lea.vmem %s4, %s199
      %p201 = scmp.lt.s32.totalorder %s16, 1
      %s202 = scalar_select %p201, %s16, 1
      %s203 = smul.addr %s202, 3
      %s204 = smul.addr %s203, 4
      %s205 = scalar_lea.vmem %s0, %s204
      %p206 = scmp.lt.s32.totalorder %s16, 1
      %s207 = scalar_select %p206, %s16, 1
      %s208 = smul.addr %s207, 2
      %s209 = smul.addr %s208, 8
      %s210 = scalar_lea.vmem %s2, %s209
      %p211 = scmp.lt.s32.totalorder %s16, 1
      %s212 = scalar_select %p211, %s16, 1
      %s213 = smul.addr %s212, 8
      %s214 = scalar_lea.vmem %s3, %s213
      %p215 = scmp.lt.s32.totalorder %s16, 1
      %s216 = scalar_select %p215, %s16, 1
      %s217 = smul.addr %s216, 8
      %s218 = scalar_lea.vmem %s4, %s217
      %v219 = vld [vmem:[%s205] sm:$0xff]
      %v220 = vld [vmem:[%s205 + $0x8] sm:$0xf]
      %223 = vst [vmem:[#allocation1] ss:$2 sm:$0xff] %v219
      %s224 = scalar_lea.vmem [#allocation1], 16
      %225 = vst [vmem:[%s224] ss:$2 sm:$0xff] %v220
      %v226 = vld.sshfl [vmem:[#allocation1] sm:$0xff pattern:$0x75316420]
      %v227 = vld.sshfl [vmem:[#allocation1 + $0x8] sm:$0xff pattern:$0x75316420]
      %v228 = vld.sshfl [vmem:[#allocation1 + $0x10] sm:$0xff pattern:$0x75316420]
      %232 = vst [vmem:[#allocation2] sm:$0xf] %v226
      %233 = vst [vmem:[#allocation2 + $0x8] sm:$0xf] %v227
      %vm234 = vcmask 257024
      %235 = vst.msk [vmem:[#allocation2 + $0x10] sm:$0xf] %vm234, %v228
      %v236 = vld [vmem:[%s205] sm:$0xff]
      %v237 = vld [vmem:[%s205 + $0x8] sm:$0xf]
      %s240 = scalar_lea.vmem [#allocation1], 1
      %241 = vst [vmem:[%s240] ss:$2 sm:$0xff] %v236
      %s242 = scalar_lea.vmem [#allocation1], 17
      %243 = vst [vmem:[%s242] ss:$2 sm:$0xff] %v237
      %v244 = vld.sshfl [vmem:[#allocation1] sm:$0xff pattern:$0x75316420]
      %v245 = vld.sshfl [vmem:[#allocation1 + $0x8] sm:$0xff pattern:$0x75316420]
      %v246 = vld.sshfl [vmem:[#allocation1 + $0x10] sm:$0xff pattern:$0x75316420]
      %247 = vrot.lane.b32.xlu0 %v244, 127
      %v248 = vpop.permute.xlu0 %247
      %249 = vrot.lane.b32.xlu0 %v245, 127
      %v250 = vpop.permute.xlu0 %249
      %251 = vrot.lane.b32.xlu0 %v246, 127
      %v252 = vpop.permute.xlu0 %251
      %vm253 = vcmask 1039360
      %v254 = vsel %vm253, %v248, %v250
      %v255 = vsel %vm253, %v250, %v252
      %259 = vst [vmem:[#allocation2] sm:$0xf0] %v254
      %260 = vst [vmem:[#allocation2 + $0x8] sm:$0xf0] %v255
      %vm261 = vcmask 261124
      %262 = vst.msk [vmem:[#allocation2 + $0x10] sm:$0xf0] %vm261, %v252
      %v263 = vld [vmem:[%s205] sm:$0xff]
      %v264 = vld [vmem:[%s205 + $0x8] sm:$0xf]
      %267 = vst [vmem:[#allocation1] ss:$2 sm:$0xff] %v263
      %s268 = scalar_lea.vmem [#allocation1], 16
      %269 = vst [vmem:[%s268] ss:$2 sm:$0xff] %v264
      %v270 = vld.sshfl [vmem:[#allocation1] sm:$0xff pattern:$0x75316420]
      %v271 = vld.sshfl [vmem:[#allocation1 + $0x8] sm:$0xff pattern:$0x75316420]
      %v272 = vld.sshfl [vmem:[#allocation1 + $0x10] sm:$0xff pattern:$0x75316420]
      %273 = vrot.lane.b32.xlu0 %v270, 126
      %v274 = vpop.permute.xlu0 %273
      %275 = vrot.lane.b32.xlu0 %v271, 126
      %v276 = vpop.permute.xlu0 %275
      %277 = vrot.lane.b32.xlu0 %v272, 126
      %v278 = vpop.permute.xlu0 %277
      %vm279 = vcmask 1031168
      %v280 = vsel %vm279, %v274, %v276
      %v281 = vsel %vm279, %v276, %v278
      %285 = vst [vmem:[#allocation2 + $0x18] sm:$0xf] %v280
      %286 = vst [vmem:[#allocation2 + $0x20] sm:$0xf] %v281
      %287 = vst.msk [vmem:[#allocation2 + $0x28] sm:$0xf] %vm234, %v278
      %v288 = vld [vmem:[%s205] sm:$0xff]
      %v289 = vld [vmem:[%s205 + $0x8] sm:$0xf]
      %s292 = scalar_lea.vmem [#allocation1], 1
      %293 = vst [vmem:[%s292] ss:$2 sm:$0xff] %v288
      %s294 = scalar_lea.vmem [#allocation1], 17
      %295 = vst [vmem:[%s294] ss:$2 sm:$0xff] %v289
      %v296 = vld.sshfl [vmem:[#allocation1] sm:$0xff pattern:$0x75316420]
      %v297 = vld.sshfl [vmem:[#allocation1 + $0x8] sm:$0xff pattern:$0x75316420]
      %v298 = vld.sshfl [vmem:[#allocation1 + $0x10] sm:$0xff pattern:$0x75316420]
      %299 = vrot.lane.b32.xlu0 %v296, 110
      %v300 = vpop.permute.xlu0 %299
      %301 = vrot.lane.b32.xlu0 %v297, 110
      %v302 = vpop.permute.xlu0 %301
      %303 = vrot.lane.b32.xlu0 %v298, 110
      %v304 = vpop.permute.xlu0 %303
      %vm305 = vcmask 900096
      %v306 = vsel %vm305, %v300, %v302
      %v307 = vsel %vm305, %v302, %v304
      %311 = vst [vmem:[#allocation2 + $0x18] sm:$0xf0] %v306
      %312 = vst [vmem:[#allocation2 + $0x20] sm:$0xf0] %v307
      %313 = vst.msk [vmem:[#allocation2 + $0x28] sm:$0xf0] %vm261, %v304
      %v314 = vld [vmem:[%s205] sm:$0xff]
      %v315 = vld [vmem:[%s205 + $0x8] sm:$0xf]
      %318 = vst [vmem:[#allocation1] ss:$2 sm:$0xff] %v314
      %s319 = scalar_lea.vmem [#allocation1], 16
      %320 = vst [vmem:[%s319] ss:$2 sm:$0xff] %v315
      %v321 = vld.sshfl [vmem:[#allocation1] sm:$0xff pattern:$0x75316420]
      %v322 = vld.sshfl [vmem:[#allocation1 + $0x8] sm:$0xff pattern:$0x75316420]
      %v323 = vld.sshfl [vmem:[#allocation1 + $0x10] sm:$0xff pattern:$0x75316420]
      %324 = vrot.lane.b32.xlu0 %v321, 109
      %v325 = vpop.permute.xlu0 %324
      %326 = vrot.lane.b32.xlu0 %v322, 109
      %v327 = vpop.permute.xlu0 %326
      %328 = vrot.lane.b32.xlu0 %v323, 109
      %v329 = vpop.permute.xlu0 %328
      %vm330 = vcmask 891904
      %v331 = vsel %vm330, %v325, %v327
      %v332 = vsel %vm330, %v327, %v329
      %336 = vst [vmem:[#allocation2 + $0x30] sm:$0xf] %v331
      %337 = vst [vmem:[#allocation2 + $0x38] sm:$0xf] %v332
      %338 = vst.msk [vmem:[#allocation2 + $0x40] sm:$0xf] %vm234, %v329
      %v339 = vld [vmem:[%s205] sm:$0xff]
      %v340 = vld [vmem:[%s205 + $0x8] sm:$0xf]
      %s343 = scalar_lea.vmem [#allocation1], 1
      %344 = vst [vmem:[%s343] ss:$2 sm:$0xff] %v339
      %s345 = scalar_lea.vmem [#allocation1], 17
      %346 = vst [vmem:[%s345] ss:$2 sm:$0xff] %v340
      %v347 = vld.sshfl [vmem:[#allocation1] sm:$0xff pattern:$0x75316420]
      %v348 = vld.sshfl [vmem:[#allocation1 + $0x8] sm:$0xff pattern:$0x75316420]
      %v349 = vld.sshfl [vmem:[#allocation1 + $0x10] sm:$0xff pattern:$0x75316420]
      %350 = vrot.lane.b32.xlu0 %v347, 108
      %v351 = vpop.permute.xlu0 %350
      %352 = vrot.lane.b32.xlu0 %v348, 108
      %v353 = vpop.permute.xlu0 %352
      %354 = vrot.lane.b32.xlu0 %v349, 108
      %v355 = vpop.permute.xlu0 %354
      %vm356 = vcmask 883712
      %v357 = vsel %vm356, %v351, %v353
      %v358 = vsel %vm356, %v353, %v355
      %362 = vst [vmem:[#allocation2 + $0x30] sm:$0xf0] %v357
      %363 = vst [vmem:[#allocation2 + $0x38] sm:$0xf0] %v358
      %364 = vst.msk [vmem:[#allocation2 + $0x40] sm:$0xf0] %vm261, %v355
      %v365 = vld [vmem:[%s205] sm:$0xff]
      %v366 = vld [vmem:[%s205 + $0x8] sm:$0xf]
      %369 = vst [vmem:[#allocation1] ss:$2 sm:$0xff] %v365
      %s370 = scalar_lea.vmem [#allocation1], 16
      %371 = vst [vmem:[%s370] ss:$2 sm:$0xff] %v366
      %v372 = vld.sshfl [vmem:[#allocation1] sm:$0xff pattern:$0x75316420]
      %v373 = vld.sshfl [vmem:[#allocation1 + $0x8] sm:$0xff pattern:$0x75316420]
      %v374 = vld.sshfl [vmem:[#allocation1 + $0x10] sm:$0xff pattern:$0x75316420]
      %375 = vrot.lane.b32.xlu0 %v372, 92
      %v376 = vpop.permute.xlu0 %375
      %377 = vrot.lane.b32.xlu0 %v373, 92
      %v378 = vpop.permute.xlu0 %377
      %379 = vrot.lane.b32.xlu0 %v374, 92
      %v380 = vpop.permute.xlu0 %379
      %vm381 = vcmask 752640
      %v382 = vsel %vm381, %v376, %v378
      %v383 = vsel %vm381, %v378, %v380
      %387 = vst [vmem:[#allocation2 + $0x48] sm:$0xf] %v382
      %388 = vst [vmem:[#allocation2 + $0x50] sm:$0xf] %v383
      %389 = vst.msk [vmem:[#allocation2 + $0x58] sm:$0xf] %vm234, %v380
      %v390 = vld [vmem:[%s205] sm:$0xff]
      %v391 = vld [vmem:[%s205 + $0x8] sm:$0xf]
      %s394 = scalar_lea.vmem [#allocation1], 1
      %395 = vst [vmem:[%s394] ss:$2 sm:$0xff] %v390
      %s396 = scalar_lea.vmem [#allocation1], 17
      %397 = vst [vmem:[%s396] ss:$2 sm:$0xff] %v391
      %v398 = vld.sshfl [vmem:[#allocation1] sm:$0xff pattern:$0x75316420]
      %v399 = vld.sshfl [vmem:[#allocation1 + $0x8] sm:$0xff pattern:$0x75316420]
      %v400 = vld.sshfl [vmem:[#allocation1 + $0x10] sm:$0xff pattern:$0x75316420]
      %401 = vrot.lane.b32.xlu0 %v398, 91
      %v402 = vpop.permute.xlu0 %401
      %403 = vrot.lane.b32.xlu0 %v399, 91
      %v404 = vpop.permute.xlu0 %403
      %405 = vrot.lane.b32.xlu0 %v400, 91
      %v406 = vpop.permute.xlu0 %405
      %vm407 = vcmask 744448
      %v408 = vsel %vm407, %v402, %v404
      %v409 = vsel %vm407, %v404, %v406
      %413 = vst [vmem:[#allocation2 + $0x48] sm:$0xf0] %v408
      %414 = vst [vmem:[#allocation2 + $0x50] sm:$0xf0] %v409
      %415 = vst.msk [vmem:[#allocation2 + $0x58] sm:$0xf0] %vm261, %v406
      %v416 = vld [vmem:[%s205] sm:$0xff]
      %v417 = vld [vmem:[%s205 + $0x8] sm:$0xf]
      %420 = vst [vmem:[#allocation1] ss:$2 sm:$0xff] %v416
      %s421 = scalar_lea.vmem [#allocation1], 16
      %422 = vst [vmem:[%s421] ss:$2 sm:$0xff] %v417
      %v423 = vld.sshfl [vmem:[#allocation1] sm:$0xff pattern:$0x75316420]
      %v424 = vld.sshfl [vmem:[#allocation1 + $0x8] sm:$0xff pattern:$0x75316420]
      %v425 = vld.sshfl [vmem:[#allocation1 + $0x10] sm:$0xff pattern:$0x75316420]
      %426 = vrot.lane.b32.xlu0 %v423, 90
      %v427 = vpop.permute.xlu0 %426
      %428 = vrot.lane.b32.xlu0 %v424, 90
      %v429 = vpop.permute.xlu0 %428
      %430 = vrot.lane.b32.xlu0 %v425, 90
      %v431 = vpop.permute.xlu0 %430
      %vm432 = vcmask 736256
      %v433 = vsel %vm432, %v427, %v429
      %v434 = vsel %vm432, %v429, %v431
      %438 = vst [vmem:[#allocation2 + $0x60] sm:$0xf] %v433
      %439 = vst [vmem:[#allocation2 + $0x68] sm:$0xf] %v434
      %440 = vst.msk [vmem:[#allocation2 + $0x70] sm:$0xf] %vm234, %v431
      %v441 = vld [vmem:[%s1] sm:$0xff]
      %v442 = vld [vmem:[#allocation2] sm:$0xff]
      %v443 = vld [vmem:[#allocation2 + $0x8] sm:$0xff]
      %v444 = vld [vmem:[#allocation2 + $0x10] sm:$0xff]
      %v445 = vld [vmem:[#allocation2 + $0x18] sm:$0xff]
      %v446 = vld [vmem:[#allocation2 + $0x20] sm:$0xff]
      %v447 = vld [vmem:[#allocation2 + $0x28] sm:$0xff]
      %v448 = vld [vmem:[#allocation2 + $0x30] sm:$0xff]
      %v449 = vld [vmem:[#allocation2 + $0x38] sm:$0xff]
      %v450 = vld [vmem:[#allocation2 + $0x40] sm:$0xff]
      %v451 = vld [vmem:[#allocation2 + $0x48] sm:$0xff]
      %v452 = vld [vmem:[#allocation2 + $0x50] sm:$0xff]
      %v453 = vld [vmem:[#allocation2 + $0x58] sm:$0xff]
      %v454 = vld [vmem:[#allocation2 + $0x60] sm:$0xf]
      %v455 = vld [vmem:[#allocation2 + $0x68] sm:$0xf]
      %v456 = vld [vmem:[#allocation2 + $0x70] sm:$0xf]
      %vm457 = vcmask 293888
      %v459 = vsel %vm457, %v441, 0
      %vm461 = vcmask 1043456
      %v463 = vsel %vm461, %v454, 0
      %v466 = vsel %vm461, %v455, 0
      %v469 = vsel %vm461, %v456, 0
      %471 = vmatpush.msra.mxu0 0.0
      %472 = vmatpush.msra.mxu0 0.0
      %473 = vmatpush.msra.mxu0 0.0
      %474 = vmatpush.msra.mxu0 0.0
      %475 = vmatpush.msra.mxu0 0.0
      %476 = vmatpush.msra.mxu0 0.0
      %477 = vmatpush.msra.mxu0 0.0
      %478 = vmatpush.msra.mxu0 0.0
      %479 = vmatpush.msra.mxu0 0.0
      %480 = vmatpush.msra.mxu0 0.0
      %481 = vmatpush.msra.mxu0 0.0
      %482 = vmatpush.msra.mxu0 %v463
      %483 = vmatpush.msra.mxu0 %v451
      %484 = vmatpush.msra.mxu0 %v448
      %485 = vmatpush.msra.mxu0 %v445
      %486 = vmatpush.msra.mxu0 %v442
      %487 = vmatmul.f32.gmra.mxu0 %v459
      %v488 = vpop.f32.mrf.mxu0
      %v489 = vadd.f32 0.0, %v488
      %490 = vdwg.mxu0
      %491 = vmatpush.msra.mxu0 0.0
      %492 = vmatpush.msra.mxu0 0.0
      %493 = vmatpush.msra.mxu0 0.0
      %494 = vmatpush.msra.mxu0 0.0
      %495 = vmatpush.msra.mxu0 0.0
      %496 = vmatpush.msra.mxu0 0.0
      %497 = vmatpush.msra.mxu0 0.0
      %498 = vmatpush.msra.mxu0 0.0
      %499 = vmatpush.msra.mxu0 0.0
      %500 = vmatpush.msra.mxu0 0.0
      %501 = vmatpush.msra.mxu0 0.0
      %502 = vmatpush.msra.mxu0 %v466
      %503 = vmatpush.msra.mxu0 %v452
      %504 = vmatpush.msra.mxu0 %v449
      %505 = vmatpush.msra.mxu0 %v446
      %506 = vmatpush.msra.mxu0 %v443
      %507 = vmatmul.f32.gmra.mxu0 %v459
      %v508 = vpop.f32.mrf.mxu0
      %v509 = vadd.f32 0.0, %v508
      %510 = vdwg.mxu0
      %511 = vmatpush.msra.mxu0 0.0
      %512 = vmatpush.msra.mxu0 0.0
      %513 = vmatpush.msra.mxu0 0.0
      %514 = vmatpush.msra.mxu0 0.0
      %515 = vmatpush.msra.mxu0 0.0
      %516 = vmatpush.msra.mxu0 0.0
      %517 = vmatpush.msra.mxu0 0.0
      %518 = vmatpush.msra.mxu0 0.0
      %519 = vmatpush.msra.mxu0 0.0
      %520 = vmatpush.msra.mxu0 0.0
      %521 = vmatpush.msra.mxu0 0.0
      %522 = vmatpush.msra.mxu0 %v469
      %523 = vmatpush.msra.mxu0 %v453
      %524 = vmatpush.msra.mxu0 %v450
      %525 = vmatpush.msra.mxu0 %v447
      %526 = vmatpush.msra.mxu0 %v444
      %527 = vmatmul.f32.gmra.mxu0 %v459
      %v528 = vpop.f32.mrf.mxu0
      %v529 = vadd.f32 0.0, %v528
      %530 = vdwg.mxu0
      %vm531 = vcmask 130048
      %532 = vst.msk [vmem:[#allocation3] sm:$0xff] %vm531, %v489
      %534 = vrot.lane.b32.xlu0 %v489, 126
      %v535 = vpop.permute.xlu0 %534
      %vm537 = vcmask 261248
      %538 = vst.msk [vmem:[#allocation3] sm:$0xff] %vm537, %v535
      %539 = vrot.lane.b32.xlu0 %v489, 124
      %v540 = vpop.permute.xlu0 %539
      %vm542 = vcmask 392448
      %543 = vst.msk [vmem:[#allocation3] sm:$0xff] %vm542, %v540
      %544 = vrot.lane.b32.xlu0 %v489, 122
      %v545 = vpop.permute.xlu0 %544
      %vm547 = vcmask 523648
      %548 = vst.msk [vmem:[#allocation3] sm:$0xff] %vm547, %v545
      %549 = vrot.lane.b32.xlu0 %v489, 120
      %v550 = vpop.permute.xlu0 %549
      %vm552 = vcmask 654848
      %553 = vst.msk [vmem:[#allocation3] sm:$0xff] %vm552, %v550
      %554 = vrot.lane.b32.xlu0 %v489, 118
      %v555 = vpop.permute.xlu0 %554
      %vm557 = vcmask 786048
      %558 = vst.msk [vmem:[#allocation3] sm:$0xff] %vm557, %v555
      %559 = vrot.lane.b32.xlu0 %v489, 116
      %v560 = vpop.permute.xlu0 %559
      %vm562 = vcmask 917248
      %563 = vst.msk [vmem:[#allocation3] sm:$0xff] %vm562, %v560
      %565 = vrot.lane.b32.xlu0 %v489, 114
      %v566 = vpop.permute.xlu0 %565
      %567 = vrot.lane.b32.xlu0 %v509, 114
      %v568 = vpop.permute.xlu0 %567
      %vm569 = vcmask 932864
      %v570 = vsel %vm569, %v566, %v568
      %vm572 = vcmask 1048448
      %573 = vst.msk [vmem:[#allocation3] sm:$0xff] %vm572, %v570
      %574 = vrot.lane.b32.xlu0 %v509, 112
      %v575 = vpop.permute.xlu0 %574
      %577 = vst.msk [vmem:[#allocation3 + $0x8] sm:$0xff] %vm531, %v575
      %578 = vrot.lane.b32.xlu0 %v509, 110
      %v579 = vpop.permute.xlu0 %578
      %581 = vst.msk [vmem:[#allocation3 + $0x8] sm:$0xff] %vm537, %v579
      %582 = vrot.lane.b32.xlu0 %v509, 108
      %v583 = vpop.permute.xlu0 %582
      %585 = vst.msk [vmem:[#allocation3 + $0x8] sm:$0xff] %vm542, %v583
      %586 = vrot.lane.b32.xlu0 %v509, 106
      %v587 = vpop.permute.xlu0 %586
      %589 = vst.msk [vmem:[#allocation3 + $0x8] sm:$0xff] %vm547, %v587
      %590 = vrot.lane.b32.xlu0 %v509, 104
      %v591 = vpop.permute.xlu0 %590
      %593 = vst.msk [vmem:[#allocation3 + $0x8] sm:$0xff] %vm552, %v591
      %594 = vrot.lane.b32.xlu0 %v509, 102
      %v595 = vpop.permute.xlu0 %594
      %597 = vst.msk [vmem:[#allocation3 + $0x8] sm:$0xff] %vm557, %v595
      %599 = vrot.lane.b32.xlu0 %v509, 100
      %v600 = vpop.permute.xlu0 %599
      %601 = vrot.lane.b32.xlu0 %v529, 100
      %v602 = vpop.permute.xlu0 %601
      %vm603 = vcmask 818176
      %v604 = vsel %vm603, %v600, %v602
      %606 = vst.msk [vmem:[#allocation3 + $0x8] sm:$0xff] %vm562, %v604
      %607 = vrot.lane.b32.xlu0 %v529, 98
      %v608 = vpop.permute.xlu0 %607
      %610 = vst.msk [vmem:[#allocation3 + $0x8] sm:$0xff] %vm572, %v608
      %v611 = vld [vmem:[#allocation3] sm:$0xff]
      %v612 = vld [vmem:[#allocation3 + $0x8] sm:$0xff]
      %613 = vst [vmem:[%s210] sm:$0xff] %v611
      %614 = vst [vmem:[%s210 + $0x8] sm:$0xff] %v612
      %v615 = vadd.f32 %v611, %v612
      %616 = vadd.xlane.f32.xlu0 %v615
      %v617 = vpop.xlane.xlu0 %616
      %v618 = vadd.f32 %v617, 0.0
      %v619 = vmul.f32 %v611, %v611
      %v620 = vmul.f32 %v612, %v612
      %v621 = vadd.f32 %v619, %v620
      %622 = vadd.xlane.f32.xlu0 %v621
      %v623 = vpop.xlane.xlu0 %622
      %v624 = vadd.f32 %v623, 0.0
      %vm625 = vcmask 7168
      %626 = vst.msk [vmem:[%s214] sm:$0xff] %vm625, %v618
      %627 = vst.msk [vmem:[%s218] sm:$0xff] %vm625, %v624
      %p628 = scmp.lt.s32.totalorder %s16, 1
      %s629 = scalar_select %p628, %s16, 1
      %s630 = smul.addr %s629, 2
      %s631 = smul.addr %s630, 8
      %s632 = scalar_lea.vmem %s2, %s631
      %p633 = scmp.lt.s32.totalorder %s16, 1
      %s634 = scalar_select %p633, %s16, 1
      %s635 = smul.addr %s634, 8
      %s636 = scalar_lea.vmem %s3, %s635
      %p637 = scmp.lt.s32.totalorder %s16, 1
      %s638 = scalar_select %p637, %s16, 1
      %s639 = smul.addr %s638, 8
      %s640 = scalar_lea.vmem %s4, %s639
      // Predicated region
      $region29: #{conv_bn_relu.2} parent=27 // pred_check
        %p641 = pneg %p81
      $region30: #{conv_bn_relu.2} parent=27 // pred_check_branch
        %643 = sbr.rel (%p641) target = $region32
      $region31: #{conv_bn_relu.2} parent=27 // pred_region
        _
      $region32: #{conv_bn_relu.2} parent=27 // pred_fallthru
        _
      // Predicated region
      $region33: #{conv_bn_relu.2} parent=27 // pred_check
        %p644 = pneg %p107
      $region34: #{conv_bn_relu.2} parent=27 // pred_check_branch
        %646 = sbr.rel (%p644) target = $region36
      $region35: #{conv_bn_relu.2} parent=27 // pred_region
        _
      $region36: #{conv_bn_relu.2} parent=27 // pred_fallthru
        _
      // Predicated region
      $region37: #{conv_bn_relu.2} parent=27 // pred_check
        %p647 = pneg %p133
      $region38: #{conv_bn_relu.2} parent=27 // pred_check_branch
        %649 = sbr.rel (%p647) target = $region40
      $region39: #{conv_bn_relu.2} parent=27 // pred_region
        _
      $region40: #{conv_bn_relu.2} parent=27 // pred_fallthru
        _
    $region28: #{conv_bn_relu.2} parent=5 // pred_fallthru
      _
    %p650 = scmp.le.s32.totalorder 2, %s11
    // Predicated region
    $region41: #{conv_bn_relu.2} parent=5 // pred_check
      %p651 = pneg %p650
    $region42: #{conv_bn_relu.2} parent=5 // pred_check_branch
      %653 = sbr.rel (%p651) target = $region44
    $region43: #{conv_bn_relu.2} parent=5 // pred_region
      %s654 = ssub.s32 %s11, 2
      // Predicated region
      $region45: #{conv_bn_relu.2} parent=43 // pred_check
        %p655 = pneg %p87
      $region46: #{conv_bn_relu.2} parent=43 // pred_check_branch
        %657 = sbr.rel (%p655) target = $region48
      $region47: #{conv_bn_relu.2} parent=43 // pred_region
        %p658 = scmp.lt.s32.totalorder %s17, 1
        %s659 = scalar_select %p658, %s17, 1
        %s660 = smul.addr %s659, 2
        %s661 = smul.addr %s660, 8
        %s662 = scalar_lea.vmem %s2, %s661
      $region48: #{conv_bn_relu.2} parent=43 // pred_fallthru
        _
      // Predicated region
      $region49: #{conv_bn_relu.2} parent=43 // pred_check
        %p663 = pneg %p113
      $region50: #{conv_bn_relu.2} parent=43 // pred_check_branch
        %665 = sbr.rel (%p663) target = $region52
      $region51: #{conv_bn_relu.2} parent=43 // pred_region
        %p666 = scmp.lt.s32.totalorder %s17, 1
        %s667 = scalar_select %p666, %s17, 1
        %s668 = smul.addr %s667, 8
        %s669 = scalar_lea.vmem %s3, %s668
      $region52: #{conv_bn_relu.2} parent=43 // pred_fallthru
        _
      // Predicated region
      $region53: #{conv_bn_relu.2} parent=43 // pred_check
        %p670 = pneg %p139
      $region54: #{conv_bn_relu.2} parent=43 // pred_check_branch
        %672 = sbr.rel (%p670) target = $region56
      $region55: #{conv_bn_relu.2} parent=43 // pred_region
        %p673 = scmp.lt.s32.totalorder %s17, 1
        %s674 = scalar_select %p673, %s17, 1
        %s675 = smul.addr %s674, 8
        %s676 = scalar_lea.vmem %s4, %s675
      $region56: #{conv_bn_relu.2} parent=43 // pred_fallthru
        _
    $region44: #{conv_bn_relu.2} parent=5 // pred_fallthru
      _
  $region6: #{conv_bn_relu.2} parent=0 // loop_footer
    %s15 = sadd.s32 1, %s11
  $region7: #{conv_bn_relu.2} parent=0 // loop_footer_branch
    %10 = sbr.rel target = $region3
  $region8: #{conv_bn_relu.2} parent=0 // loop_exit
    _

</llo_original>
